<compile_context>
chip_gen: v7x
topology: tpu7x:2x2x1
jax: 0.10.0
libtpu: 0.0.40
codegen_flags: <defaults>
</compile_context>

<pallas_src>
import functools

import jax
import jax.numpy as jnp
from jax.experimental import pallas as pl
from jax.experimental.pallas import tpu as pltpu


def _adm_softmax_kernel(x_ref, w_ref, lab_ref, out_ref, *, s, m_l, m_s):
    x = x_ref[...]                                   # (T, D), native dtype
    xf = x.astype(jnp.float32)
    w = w_ref[...]                                   # (C, D), bf16 (resident)
    lab = lab_ref[...]                               # (1, T), int32

    t, d = x.shape
    c = w.shape[0]

    # Row L2 norms as a lane-dense (1, T) row: sq[0, t] = sum_d x[t, d]^2.
    # Computed on the (otherwise idle) MXU so no lane-sparse (T, 1) temporaries or
    # per-row XLU lane-reductions are created.  f32 operands keep the norm accurate.
    ones = jnp.ones((8, d), jnp.float32)
    sq = jax.lax.dot_general(
        ones, xf * xf,
        dimension_numbers=(((1,), (1,)), ((), ())),
        preferred_element_type=jnp.float32,
    )[0:1, :]                                        # (1, T)
    inv_norm = jax.lax.rsqrt(jnp.maximum(sq, jnp.float32(1e-24)))  # == 1/max(|x|,1e-12)

    # Class logits, batch-in-lanes: wf[c, t] = <w_c, x_t> / |x_t|.
    # bf16 MXU matmul with f32 accumulation; the per-sample normalization is applied
    # to the (C, T) result, which is algebraically identical to normalizing x first.
    wf = jax.lax.dot_general(
        w, x.astype(jnp.bfloat16),
        dimension_numbers=(((1,), (1,)), ((), ())),
        preferred_element_type=jnp.float32,
    ) * inv_norm                                     # (C, T)

    class_ids = jax.lax.broadcasted_iota(jnp.int32, (c, t), 0)
    onehot = class_ids == lab                        # (C, T)

    # Per-sample additive margin (labels expected in {0, 1}: self.m = [m_s, m_l]).
    m = jnp.where(lab == 1, jnp.float32(m_l), jnp.float32(m_s))        # (1, T)

    # Adjusted logits: s*(wf - m) at the target class, s*wf elsewhere.
    adj = jnp.float32(s) * (wf - jnp.where(onehot, m, jnp.float32(0.0)))  # (C, T)

    # L_t = adj[y_t, t] - logsumexp_c(adj[c, t]) -- identical to the reference
    # numerator/denominator formulation, but max-stabilized so exp() cannot overflow.
    cmax = jnp.max(adj, axis=0, keepdims=True)                          # (1, T)
    lse = cmax + jnp.log(jnp.sum(jnp.exp(adj - cmax), axis=0, keepdims=True))
    target = jnp.sum(jnp.where(onehot, adj, jnp.float32(0.0)), axis=0, keepdims=True)

    out_ref[...] = target - lse                      # (1, T), lane-dense store


def _choose_tile_n(n, d, x_itemsize, target_bytes=2 * 1024 * 1024):
    """Row tile: lane-aligned (multiple of 128), sized by bytes (~2 MiB per x tile)."""
    if n <= 256:
        return n            # single tile: block_shape == full array dims is always legal
    rows = target_bytes // max(1, d * x_itemsize)
    rows = max(128, min(8192, (rows // 128) * 128))
    # Keep at least 2 grid steps so the "parallel" axis can span both v7x TensorCores.
    rows = min(rows, max(128, ((n // 2) // 128) * 128))
    return rows


def _vmem_limit_bytes(tile_n, d, c, x_itemsize):
    """Scoped-VMEM budget: double-buffered x tile + resident weight + temporaries."""
    lanes = lambda v: -(-v // 128) * 128
    subs = lambda v: -(-v // 8) * 8
    x_tile = subs(tile_n) * lanes(d) * x_itemsize        # padded VMEM tile footprint
    x_f32 = subs(tile_n) * lanes(d) * 4                  # in-kernel f32 / bf16 copies
    w_tile = subs(c) * lanes(d) * 2                      # bf16 weight
    ct = subs(c) * lanes(tile_n) * 4                     # (C, T) temporaries
    rows = 8 * lanes(tile_n) * 4                         # (1, T) / (8, T) temporaries
    small = 4 * lanes(tile_n) * 4                        # labels + output blocks
    est = 2 * x_tile + 2 * w_tile + 3 * x_f32 + 4 * ct + 8 * rows + small
    est = int(est * 1.5) + (2 << 20)                     # compiler temporaries / spill slack
    # Clamp into a range that is safe across generations (v5e scoped default 16 MiB,
    # v7x physical VMEM 64 MiB with a 32 MiB scoped default).
    return int(min(max(est, 16 * 1024 * 1024), 32 * 1024 * 1024))


def adm_softmax_loss(x, labels, weight, s=30.0, m_l=0.4, m_s=0.1):
    """x: (N, in_features), labels: (N,) int in {0, 1}, weight: (out_features, in_features)."""
    n, d = x.shape
    c = weight.shape[0]

    # bf16 weight once in the wrapper: halves its HBM/VMEM footprint; f32 accumulation
    # in the kernel keeps accuracy.  (Weights are NOT normalized -- see module note.)
    w_bf16 = weight.astype(jnp.bfloat16)                  # (C, D)
    lab2d = labels.astype(jnp.int32).reshape(1, n)        # (1, N), lane-dense

    tile_n = _choose_tile_n(n, d, x.dtype.itemsize)
    grid = (pl.cdiv(n, tile_n),)

    kernel = functools.partial(
        _adm_softmax_kernel, s=float(s), m_l=float(m_l), m_s=float(m_s))

    # TODO(synk): for very large out_features the resident (C, D) weight no longer fits
    # in VMEM; add a C-tiled grid axis with a flash-style online logsumexp.
    per_row = pl.pallas_call(
        kernel,
        out_shape=jax.ShapeDtypeStruct((1, n), jnp.float32),
        grid=grid,
        in_specs=[
            pl.BlockSpec((tile_n, d), lambda i: (i, 0)),  # x tile (native dtype), pipelined
            # Resident weight: constant index_map -> fetched once, stays in VMEM.
            # (Could use pipeline_mode=pl.Buffered(1); left double-buffered, it is small.)
            pl.BlockSpec((c, d), lambda i: (0, 0)),
            pl.BlockSpec((1, tile_n), lambda i: (0, i)),  # labels, lane-dense
        ],
        out_specs=pl.BlockSpec((1, tile_n), lambda i: (0, i)),
        compiler_params=pltpu.CompilerParams(
            dimension_semantics=("parallel",),
            vmem_limit_bytes=_vmem_limit_bytes(tile_n, d, c, x.dtype.itemsize),
        ),
    )(x, w_bf16, lab2d)

    # Tiny final mean in the wrapper keeps the grid axis fully parallel.
    return -jnp.mean(per_row[0, :])


def _reference_loss(x, labels, weight, s=30.0, m_l=0.4, m_s=0.1):
    """Pure-JAX all-f32 mirror of the PyTorch forward (sanity check)."""
    xf = x.astype(jnp.float32)
    wf32 = weight.astype(jnp.float32)
    x_n = xf / jnp.maximum(jnp.linalg.norm(xf, axis=1, keepdims=True), 1e-12)
    wf = x_n @ wf32.T
    m = jnp.where(labels == 1, jnp.float32(m_l), jnp.float32(m_s))
    target = jnp.take_along_axis(wf, labels[:, None], axis=1)[:, 0]
    numerator = s * (target - m)
    onehot = jax.nn.one_hot(labels, wf32.shape[0], dtype=bool)
    excl_sum = jnp.sum(jnp.where(onehot, 0.0, jnp.exp(s * wf)), axis=1)
    L = numerator - jnp.log(jnp.exp(numerator) + excl_sum)
    return -jnp.mean(L)


if __name__ == "__main__":
    N, IN_FEATURES, OUT_FEATURES = 8, 32, 2

    key = jax.random.PRNGKey(0)
    kx, kl, kw = jax.random.split(key, 3)

    x = jax.random.normal(kx, (N, IN_FEATURES), dtype=jnp.float32)
    labels = jax.random.randint(kl, (N,), 0, OUT_FEATURES, dtype=jnp.int32)
    # Deterministic synthetic fc weight (nn.Linear-style shape (out, in), no bias).
    weight = jax.random.normal(kw, (OUT_FEATURES, IN_FEATURES), dtype=jnp.float32) * (
        1.0 / jnp.sqrt(IN_FEATURES)
    )

    # Mirror the PyTorch module's label-range asserts (host-side, not in-kernel).
    assert int(jnp.min(labels)) >= 0 and int(jnp.max(labels)) < OUT_FEATURES

    loss = adm_softmax_loss(x, labels, weight)
    jax.block_until_ready(loss)

    ref = _reference_loss(x, labels, weight)
    assert bool(jnp.isfinite(loss)), "kernel produced non-finite loss"
    # bf16 class-logit matmul (f32 accumulation) amplified by s=30 bounds the gap vs.
    # the all-f32 reference at ~1e-2; any structural bug would be O(1) off.
    assert jnp.allclose(loss, ref, rtol=5e-2, atol=5e-2), (loss, ref)

    print("KERNEL_OK")
</pallas_src>

<mosaic_0001>
module attributes {stable_mosaic.version = 11 : i64} {
  func.func @_adm_softmax_kernel(%arg0: i32, %arg1: memref<8x32xf32, #tpu.memory_space<vmem>>, %arg2: memref<2x32xbf16, #tpu.memory_space<vmem>>, %arg3: memref<1x8xi32, #tpu.memory_space<vmem>>, %arg4: memref<1x8xf32, #tpu.memory_space<vmem>>) attributes {dimension_semantics = [#tpu.dimension_semantics<parallel>], iteration_bounds = array<i64: 1>, scalar_prefetch = 0 : i64, scratch_operands = 0 : i64, tpu.core_type = #tpu.core_type<tc>, window_params = [{transform_indices = @transform_0, window_bounds = array<i64: 8, 32>}, {pipeline_mode = #tpu.pipeline_mode<synchronous>, transform_indices = @transform_1, window_bounds = array<i64: 2, 32>}, {transform_indices = @transform_2, window_bounds = array<i64: 1, 8>}, {transform_indices = @transform_3, window_bounds = array<i64: 1, 8>}]} {
    %c0 = arith.constant 0 : index
    %c0_0 = arith.constant 0 : index
    %0 = vector.load %arg1[%c0, %c0_0] : memref<8x32xf32, #tpu.memory_space<vmem>>, vector<8x32xf32>
    %c0_1 = arith.constant 0 : index
    %c0_2 = arith.constant 0 : index
    %1 = vector.load %arg2[%c0_1, %c0_2] : memref<2x32xbf16, #tpu.memory_space<vmem>>, vector<2x32xbf16>
    %c0_3 = arith.constant 0 : index
    %c0_4 = arith.constant 0 : index
    %2 = vector.load %arg3[%c0_3, %c0_4] : memref<1x8xi32, #tpu.memory_space<vmem>>, vector<1x8xi32>
    %cst = arith.constant 1.000000e+00 : f32
    %3 = vector.broadcast %cst : f32 to vector<8x32xf32>
    %4 = arith.mulf %0, %0 : vector<8x32xf32>
    %cst_5 = arith.constant dense<0.000000e+00> : vector<8x8xf32>
    %5 = tpu.matmul %3, %4, %cst_5 {dimension_numbers = #tpu.dot_dimension_numbers<[1], [1], [0], [0], [0, 0, 1, 0], [], []>} : vector<8x32xf32>, vector<8x32xf32>, vector<8x8xf32> -> vector<8x8xf32>
    %6 = vector.extract_strided_slice %5 {offsets = [0, 0], sizes = [1, 8], strides = [1, 1]} : vector<8x8xf32> to vector<1x8xf32>
    %cst_6 = arith.constant 1.000000e-24 : f32
    %7 = vector.broadcast %cst_6 : f32 to vector<1x8xf32>
    %8 = arith.maximumf %6, %7 : vector<1x8xf32>
    %9 = math.rsqrt %8 : vector<1x8xf32>
    %10 = arith.truncf %0 : vector<8x32xf32> to vector<8x32xbf16>
    %cst_7 = arith.constant dense<0.000000e+00> : vector<2x8xf32>
    %11 = tpu.matmul %1, %10, %cst_7 {dimension_numbers = #tpu.dot_dimension_numbers<[1], [1], [0], [0], [0, 0, 1, 0], [], []>} : vector<2x32xbf16>, vector<8x32xbf16>, vector<2x8xf32> -> vector<2x8xf32>
    %12 = vector.broadcast %9 : vector<1x8xf32> to vector<2x8xf32>
    %13 = arith.mulf %11, %12 : vector<2x8xf32>
    %14 = tpu.iota {dimensions = array<i32: 0>} : vector<2x8xi32>
    %15 = vector.broadcast %2 : vector<1x8xi32> to vector<2x8xi32>
    %16 = arith.cmpi eq, %14, %15 : vector<2x8xi32>
    %c1_i32 = arith.constant 1 : i32
    %17 = vector.broadcast %c1_i32 : i32 to vector<1x8xi32>
    %18 = arith.cmpi eq, %2, %17 : vector<1x8xi32>
    %cst_8 = arith.constant 4.000000e-01 : f32
    %cst_9 = arith.constant 1.000000e-01 : f32
    %19 = vector.broadcast %cst_8 : f32 to vector<1x8xf32>
    %20 = vector.broadcast %cst_9 : f32 to vector<1x8xf32>
    %21 = arith.select %18, %19, %20 : vector<1x8xi1>, vector<1x8xf32>
    %cst_10 = arith.constant 0.000000e+00 : f32
    %22 = vector.shape_cast %21 : vector<1x8xf32> to vector<1x8xf32>
    %23 = vector.broadcast %22 : vector<1x8xf32> to vector<2x8xf32>
    %24 = vector.broadcast %cst_10 : f32 to vector<2x8xf32>
    %25 = arith.select %16, %23, %24 : vector<2x8xi1>, vector<2x8xf32>
    %26 = arith.subf %13, %25 : vector<2x8xf32>
    %cst_11 = arith.constant 3.000000e+01 : f32
    %27 = vector.broadcast %cst_11 : f32 to vector<2x8xf32>
    %28 = arith.mulf %27, %26 : vector<2x8xf32>
    %cst_12 = arith.constant dense<0xFF800000> : vector<8xf32>
    %29 = vector.multi_reduction <maximumf>, %28, %cst_12 [0] : vector<2x8xf32> to vector<8xf32>
    %30 = vector.shape_cast %29 : vector<8xf32> to vector<1x8xf32>
    %31 = vector.broadcast %30 : vector<1x8xf32> to vector<2x8xf32>
    %32 = arith.subf %28, %31 : vector<2x8xf32>
    %33 = math.exp %32 : vector<2x8xf32>
    %cst_13 = arith.constant dense<0.000000e+00> : vector<8xf32>
    %34 = vector.multi_reduction <add>, %33, %cst_13 [0] : vector<2x8xf32> to vector<8xf32>
    %35 = vector.shape_cast %34 : vector<8xf32> to vector<1x8xf32>
    %36 = math.log %35 : vector<1x8xf32>
    %37 = arith.addf %30, %36 : vector<1x8xf32>
    %cst_14 = arith.constant 0.000000e+00 : f32
    %38 = vector.broadcast %cst_14 : f32 to vector<2x8xf32>
    %39 = arith.select %16, %28, %38 : vector<2x8xi1>, vector<2x8xf32>
    %cst_15 = arith.constant dense<0.000000e+00> : vector<8xf32>
    %40 = vector.multi_reduction <add>, %39, %cst_15 [0] : vector<2x8xf32> to vector<8xf32>
    %41 = vector.shape_cast %40 : vector<8xf32> to vector<1x8xf32>
    %42 = arith.subf %41, %37 : vector<1x8xf32>
    %c0_16 = arith.constant 0 : index
    %c0_17 = arith.constant 0 : index
    %43 = vector.load %arg4[%c0_16, %c0_17] : memref<1x8xf32, #tpu.memory_space<vmem>>, vector<1x8xf32>
    tpu.vector_store %arg4[%c0_16, %c0_17], %42 {strides = array<i32>} : memref<1x8xf32, #tpu.memory_space<vmem>>, vector<1x8xf32>,
    return
  }
  func.func @transform_0(%arg0: i32) -> (i32, i32) {
    %c0_i32 = arith.constant 0 : i32
    %c0_i32_0 = arith.constant 0 : i32
    return %arg0, %c0_i32 : i32, i32
  }
  func.func @transform_1(%arg0: i32) -> (i32, i32) {
    %c0_i32 = arith.constant 0 : i32
    %c0_i32_0 = arith.constant 0 : i32
    %c0_i32_1 = arith.constant 0 : i32
    return %c0_i32, %c0_i32_0 : i32, i32
  }
  func.func @transform_2(%arg0: i32) -> (i32, i32) {
    %c0_i32 = arith.constant 0 : i32
    %c0_i32_0 = arith.constant 0 : i32
    return %c0_i32, %arg0 : i32, i32
  }
  func.func @transform_3(%arg0: i32) -> (i32, i32) {
    %c0_i32 = arith.constant 0 : i32
    %c0_i32_0 = arith.constant 0 : i32
    return %c0_i32, %arg0 : i32, i32
  }
}

</mosaic_0001>

<llo_original>
// kernel: tpu_custom_call.1
$region0: #{tpu_custom_call.1}
  #allocation0 [shape = 'u32[]', space=smem, size = 0x4, offset = 0x4, fixed_abs, tag = 'smem constant byte address 0x4 - core index']
  #allocation1 [shape = 'u32[144,128]{1,0:T(1,128)}', space=vmem, size = 0x12000, scoped, tag = 'internal scratch']
  %s0 = inlined_call_operand.hbm [shape: f32[8,32], index: 0, kind: input, shape index: {}]
  %s1 = inlined_call_operand.vmem [shape: bf16[2,32], index: 1, kind: input, shape index: {}]
  %s2 = inlined_call_operand.vmem [shape: s32[1,8], index: 2, kind: input, shape index: {}]
  %s3 = inlined_call_operand.hbm [shape: f32[1,8], index: 3, kind: output, shape index: {}]
  %s4 = sld [smem:[#allocation0]]
  $region26: #{tpu_custom_call.1} parent=0
    _
  %s6 = ssub.s32 1, %s4
  %s7 = scalar_select 0, %s6, %s4
  $region1: #{tpu_custom_call.1} parent=0
    #allocation2 [shape = 'u8[4096]{0}', space=vmem, size = 0x1000, scoped, tag = 'input window, operand 0, single buffered']
    #allocation3 [shape = 's32[1]{0}', space=sflag, size = 0x4, scoped, tag = 'scoped memory for tpu_custom_call.1']
    #allocation4 [shape = 's32[1]{0}', space=sflag, size = 0x4, scoped, tag = 'scoped memory for tpu_custom_call.1']
    #allocation5 [shape = 'u8[512]{0}', space=vmem, size = 0x400, scoped, tag = 'output window, operand 0, single buffered']
    %8 = vsyncpa [#allocation3], 0
    %9 = vsyncpa [#allocation4], 0
    // Predicated region
    $region2: #{tpu_custom_call.1} parent=1 // pred_check
      _
    $region3: #{tpu_custom_call.1} parent=1 // pred_check_branch
      %11 = sbr.rel (0) target = $region5
    $region4: #{tpu_custom_call.1} parent=1 // pred_region
      %s13 = ssub.s32 128, 128
      %14 = vsyncadd [#allocation3], %s13
      %s16 = sshll.u32 [#allocation2], 4
      %s17 = int_to_ptr.vmem [resolvable:$true] %s16
      %19 = dma.hbm_to_vmem [thread:$0]  %s0, 128, %s17, [#allocation3]
    $region5: #{tpu_custom_call.1} parent=1 // pred_fallthru
      _
    // Predicated region
    $region6: #{tpu_custom_call.1} parent=1 // pred_check
      _
    $region7: #{tpu_custom_call.1} parent=1 // pred_check_branch
      %21 = sbr.rel (0) target = $region9
    $region8: #{tpu_custom_call.1} parent=1 // pred_region
      _
    $region9: #{tpu_custom_call.1} parent=1 // pred_fallthru
      _
    // Predicated region
    $region10: #{tpu_custom_call.1} parent=1 // pred_check
      _
    $region11: #{tpu_custom_call.1} parent=1 // pred_check_branch
      %23 = sbr.rel (0) target = $region13
    $region12: #{tpu_custom_call.1} parent=1 // pred_region
      _
    $region13: #{tpu_custom_call.1} parent=1 // pred_fallthru
      _
    // Predicated region
    $region14: #{tpu_custom_call.1} parent=1 // pred_check
      _
    $region15: #{tpu_custom_call.1} parent=1 // pred_check_branch
      %25 = sbr.rel (0) target = $region17
    $region16: #{tpu_custom_call.1} parent=1 // pred_region
      %26 = dma.done [#allocation3], 128
    $region17: #{tpu_custom_call.1} parent=1 // pred_fallthru
      _
    %v28 = vld [vmem:[#allocation2] sm:$0xff]
    %v29 = vld [vmem:[%s1] sm:$0x1]
    %v30 = vld [vmem:[%s2] sm:$0x1]
    %v31 = vmul.f32 %v28, %v28
    %vm32 = vcmask 261120
    %v34 = vsel %vm32, 1.0, 0
    %v37 = vsel %vm32, %v31, 0
    %39 = vmatprep.subr.mxu0 0.0
    %40 = vmatpush1.xpose.msra.mxu0 %v37
    %41 = vmatprep.subr.mxu0 0.0
    %42 = vmatpush1.xpose.msra.mxu0 0.0
    %43 = vmatprep.subr.mxu0 0.0
    %44 = vmatpush1.xpose.msra.mxu0 0.0
    %45 = vmatprep.subr.mxu0 0.0
    %46 = vmatpush1.xpose.msra.mxu0 0.0
    %47 = vmatprep.subr.mxu0 0.0
    %48 = vmatpush1.xpose.msra.mxu0 0.0
    %49 = vmatprep.subr.mxu0 0.0
    %50 = vmatpush1.xpose.msra.mxu0 0.0
    %51 = vmatprep.subr.mxu0 0.0
    %52 = vmatpush1.xpose.msra.mxu0 0.0
    %53 = vmatprep.subr.mxu0 0.0
    %54 = vmatpush1.xpose.msra.mxu0 0.0
    %55 = vmatprep.subr.mxu0 0.0
    %56 = vmatpush1.xpose.msra.mxu0 0.0
    %57 = vmatprep.subr.mxu0 0.0
    %58 = vmatpush1.xpose.msra.mxu0 0.0
    %59 = vmatprep.subr.mxu0 0.0
    %60 = vmatpush1.xpose.msra.mxu0 0.0
    %61 = vmatprep.subr.mxu0 0.0
    %62 = vmatpush1.xpose.msra.mxu0 0.0
    %63 = vmatprep.subr.mxu0 0.0
    %64 = vmatpush1.xpose.msra.mxu0 0.0
    %65 = vmatprep.subr.mxu0 0.0
    %66 = vmatpush1.xpose.msra.mxu0 0.0
    %67 = vmatprep.subr.mxu0 0.0
    %68 = vmatpush1.xpose.msra.mxu0 0.0
    %69 = vmatprep.subr.mxu0 0.0
    %70 = vmatpush1.xpose.msra.mxu0 0.0
    %71 = vmatprep.subr.mxu0 0.0
    %72 = vmatpush1.xpose.msra.mxu0 0.0
    %73 = vmatprep.subr.mxu0 0.0
    %74 = vmatpush1.xpose.msra.mxu0 0.0
    %75 = vmatprep.subr.mxu0 0.0
    %76 = vmatpush1.xpose.msra.mxu0 0.0
    %77 = vmatprep.subr.mxu0 0.0
    %78 = vmatpush1.xpose.msra.mxu0 0.0
    %79 = vmatprep.subr.mxu0 0.0
    %80 = vmatpush1.xpose.msra.mxu0 0.0
    %81 = vmatprep.subr.mxu0 0.0
    %82 = vmatpush1.xpose.msra.mxu0 0.0
    %83 = vmatprep.subr.mxu0 0.0
    %84 = vmatpush1.xpose.msra.mxu0 0.0
    %85 = vmatprep.subr.mxu0 0.0
    %86 = vmatpush1.xpose.msra.mxu0 0.0
    %87 = vmatprep.subr.mxu0 0.0
    %88 = vmatpush1.xpose.msra.mxu0 0.0
    %89 = vmatprep.subr.mxu0 0.0
    %90 = vmatpush1.xpose.msra.mxu0 0.0
    %91 = vmatprep.subr.mxu0 0.0
    %92 = vmatpush1.xpose.msra.mxu0 0.0
    %93 = vmatprep.subr.mxu0 0.0
    %94 = vmatpush1.xpose.msra.mxu0 0.0
    %95 = vmatprep.subr.mxu0 0.0
    %96 = vmatpush1.xpose.msra.mxu0 0.0
    %97 = vmatprep.subr.mxu0 0.0
    %98 = vmatpush1.xpose.msra.mxu0 0.0
    %99 = vmatprep.subr.mxu0 0.0
    %100 = vmatpush1.xpose.msra.mxu0 0.0
    %101 = vmatprep.subr.mxu0 0.0
    %102 = vmatpush1.xpose.msra.mxu0 0.0
    %103 = vmatprep.mubr.f32.mxu0 0.0
    %104 = vmatmul.mubr.f32.gmra.mrb[0].mxu0 %v34
    %v105 = vpop.f32.mrb[0].mxu0
    %v106 = vadd.f32 0.0, %v105
    %v107 = vpop.f32.mrb[0].mxu0
    %108 = vdwg.mxu0
    %v109 = vmax.f32 %v106, 1e-24
    %v110 = vrsqrt.pop %v109
    %v111 = vpack.c.bf16 %v28, %v28
    %v113 = vsel %vm32, %v29, 0
    %v116 = vsel %vm32, %v111, 0
    %118 = vmatprep.subr.bf16.mxu0 0
    %119 = vmatpush1.bf16.xpose.msra.mxu0 %v116
    %120 = vmatprep.subr.bf16.mxu0 0
    %121 = vmatpush1.bf16.xpose.msra.mxu0 0
    %122 = vmatprep.subr.bf16.mxu0 0
    %123 = vmatpush1.bf16.xpose.msra.mxu0 0
    %124 = vmatprep.subr.bf16.mxu0 0
    %125 = vmatpush1.bf16.xpose.msra.mxu0 0
    %126 = vmatprep.subr.bf16.mxu0 0
    %127 = vmatpush1.bf16.xpose.msra.mxu0 0
    %128 = vmatprep.subr.bf16.mxu0 0
    %129 = vmatpush1.bf16.xpose.msra.mxu0 0
    %130 = vmatprep.subr.bf16.mxu0 0
    %131 = vmatpush1.bf16.xpose.msra.mxu0 0
    %132 = vmatprep.subr.bf16.mxu0 0
    %133 = vmatpush1.bf16.xpose.msra.mxu0 0
    %134 = vmatprep.subr.bf16.mxu0 0
    %135 = vmatpush1.bf16.xpose.msra.mxu0 0
    %136 = vmatprep.subr.bf16.mxu0 0
    %137 = vmatpush1.bf16.xpose.msra.mxu0 0
    %138 = vmatprep.subr.bf16.mxu0 0
    %139 = vmatpush1.bf16.xpose.msra.mxu0 0
    %140 = vmatprep.subr.bf16.mxu0 0
    %141 = vmatpush1.bf16.xpose.msra.mxu0 0
    %142 = vmatprep.subr.bf16.mxu0 0
    %143 = vmatpush1.bf16.xpose.msra.mxu0 0
    %144 = vmatprep.subr.bf16.mxu0 0
    %145 = vmatpush1.bf16.xpose.msra.mxu0 0
    %146 = vmatprep.subr.bf16.mxu0 0
    %147 = vmatpush1.bf16.xpose.msra.mxu0 0
    %148 = vmatprep.subr.bf16.mxu0 0
    %149 = vmatpush1.bf16.xpose.msra.mxu0 0
    %150 = vmatprep.mubr.bf16.mxu0 0
    %151 = vmatmul.mubr.bf16.gmra.mrb[0].mxu0 %v113
    %v152 = vpop.f32.mrb[0].mxu0
    %v153 = vadd.f32 0.0, %v152
    %v154 = vpop.f32.mrb[0].mxu0
    %v155 = vpop.f32.mrb[0].mxu0
    %v156 = vpop.f32.mrb[0].mxu0
    %157 = vdwg.mxu0
    %v158 = vlaneseq
    %v159 = vshrl.u32 %v158, 7
    %v160 = vsub.s32 0, %v159
    %v161 = vrot.slane %v110, %v160
    %v162 = vmul.f32 %v153, %v161
    %v163 = vlaneseq
    %v164 = vshrl.u32 %v163, 7
    %v165 = vlaneseq
    %v166 = vshrl.u32 %v165, 7
    %v167 = vsub.s32 0, %v166
    %v168 = vrot.slane %v30, %v167
    %vm169 = vcmp.eq.s32.totalorder %v164, %v168
    %vm170 = vcmp.eq.s32.totalorder %v30, 1
    %v171 = vsel %vm170, 0.4, 0.1
    %v173 = vlaneseq
    %v174 = vshrl.u32 %v173, 7
    %v175 = vsub.s32 0, %v174
    %v176 = vrot.slane %v171, %v175
    %v178 = vsel %vm169, %v176, 0.0
    %v179 = vsub.f32 %v162, %v178
    %v180 = vmul.f32 %v179, 30.0
    %vm181 = vcmask 58368
    %v182 = vsel %vm181, %v180, -inf
    %v183 = vrot.slane %v182, 4
    %v184 = vmax.f32 %v182, %v183
    %v185 = vrot.slane %v184, 2
    %v186 = vmax.f32 %v184, %v185
    %v187 = vrot.slane %v186, 1
    %v188 = vmax.f32 %v186, %v187
    %v189 = vsub.f32 %v180, %v188
    %v190 = vmul.f32 %v189, 1.442695
    %v191 = vpow.pop %v190
    %v192 = vsel %vm181, %v191, 0.0
    %v193 = vrot.slane %v192, 4
    %v194 = vadd.f32 %v192, %v193
    %v195 = vrot.slane %v194, 2
    %v196 = vadd.f32 %v194, %v195
    %v197 = vrot.slane %v196, 1
    %v198 = vadd.f32 %v196, %v197
    %v199 = vlog2.pop %v198
    %v200 = vmul.f32 %v199, 0.6931472
    %v201 = vadd.f32 %v188, %v200
    %v202 = vsel %vm169, %v180, 0.0
    %v203 = vsel %vm181, %v202, 0.0
    %v204 = vrot.slane %v203, 4
    %v205 = vadd.f32 %v203, %v204
    %v206 = vrot.slane %v205, 2
    %v207 = vadd.f32 %v205, %v206
    %v208 = vrot.slane %v207, 1
    %v209 = vadd.f32 %v207, %v208
    %v210 = vsub.f32 %v209, %v201
    %vm211 = vcmask 57344
    %212 = vst.msk [vmem:[#allocation5] sm:$0x1] %vm211, %v210
    // Predicated region
    $region18: #{tpu_custom_call.1} parent=1 // pred_check
      _
    $region19: #{tpu_custom_call.1} parent=1 // pred_check_branch
      %214 = sbr.rel (0) target = $region21
    $region20: #{tpu_custom_call.1} parent=1 // pred_region
      %s216 = ssub.s32 16, 16
      %217 = vsyncadd [#allocation4], %s216
      %s219 = sshll.u32 [#allocation5], 4
      %s220 = int_to_ptr.vmem [resolvable:$true] %s219
      %222 = dma.vmem_to_hbm [thread:$0]  %s220, 16, %s3, [#allocation4]
    $region21: #{tpu_custom_call.1} parent=1 // pred_fallthru
      _
    // Predicated region
    $region22: #{tpu_custom_call.1} parent=1 // pred_check
      _
    $region23: #{tpu_custom_call.1} parent=1 // pred_check_branch
      %224 = sbr.rel (0) target = $region25
    $region24: #{tpu_custom_call.1} parent=1 // pred_region
      %225 = dma.done [#allocation4], 16
    $region25: #{tpu_custom_call.1} parent=1 // pred_fallthru
      _
    %226 = vsyncpa [#allocation3], 1
    %227 = vsyncpa [#allocation4], 1

</llo_original>
